<compile_context>
chip_gen: v7x
topology: tpu7x:2x2x1
jax: 0.10.0
libtpu: 0.0.40
codegen_flags: <defaults>
</compile_context>

<pallas_src>
import jax
import jax.numpy as jnp
import numpy as np
from jax.experimental import pallas as pl
from jax.experimental.pallas import tpu as pltpu


def coord_attn_kernel(x_ref, w1_ref, b1_ref, wh_ref, bh_ref, ww_ref, bw_ref, o_ref):
    x = x_ref[...]                                      # (bt, h, w, c), channels-last

    # AdaptiveAvgPool2d((None, 1)) == mean over W ; ((1, None)) == mean over H.
    # Accumulate in f32 even if x is bf16 (no full-slab f32 copy needed).
    x_h = jnp.mean(x, axis=2, dtype=jnp.float32)        # (bt, h, c)
    x_w = jnp.mean(x, axis=1, dtype=jnp.float32)        # (bt, w, c)

    w1 = w1_ref[...]                                    # (c, mip)   BN-folded conv1
    b1 = b1_ref[...]                                    # (1, mip)

    def gate(pooled, wg, bg):
        # pooled: (bt, L, c) ; wg: (mip, oup) ; bg: (1, oup) -> (bt, L, oup)
        y = jnp.einsum('blc,cm->blm', pooled, w1,
                       preferred_element_type=jnp.float32) + b1[None]   # (bt, L, mip)
        # Hardswish: y * relu6(y + 3) / 6
        y = y * jnp.clip(y + 3.0, 0.0, 6.0) * (1.0 / 6.0)
        a = jax.nn.sigmoid(
            jnp.einsum('blm,mo->blo', y, wg,
                       preferred_element_type=jnp.float32) + bg[None])  # (bt, L, oup)
        return a

    a_h = gate(x_h, wh_ref[...], bh_ref[...])           # (bt, h, oup)
    a_w = gate(x_w, ww_ref[...], bw_ref[...])           # (bt, w, oup)

    # out = identity * a_w * a_h  (oup == c, so this matches the PyTorch broadcast)
    out = x.astype(jnp.float32) * a_h[:, :, None, :] * a_w[:, None, :, :]
    o_ref[...] = out.astype(o_ref.dtype)


def _pick_block_batch(n, per_batch_bytes, budget_bytes):
    """Largest batch-block keeping double-buffered in+out blocks under budget,
    preferring an even grid length (feeds both v7x TensorCores)."""
    divisors = [d for d in range(1, n + 1) if n % d == 0]
    fits = [d for d in divisors if 4 * d * per_batch_bytes <= budget_bytes] or [1]
    even = [d for d in fits if (n // d) % 2 == 0]
    return max(even) if even else max(fits)


def coordinate_attention(x, w1, b1, bn_scale, bn_shift, wh, bh, ww, bw,
                         *, block_budget_bytes=32 << 20):
    """x: (n, c, h, w) NCHW (PyTorch layout). Params in PyTorch shapes:
    w1 (mip, c), b1 (mip,), bn_scale/bn_shift (mip,), wh/ww (oup, mip), bh/bw (oup,)."""
    n, c, h, w = x.shape
    mip = w1.shape[0]
    oup = wh.shape[0]
    assert oup == c, "final broadcast multiply requires oup == inp (as in PyTorch usage)"

    # Fold inference BN into conv1:  s*(W x + b) + t  ==  (s*W) x + (s*b + t)
    w1f = (w1 * bn_scale[:, None]).T.astype(jnp.float32)              # (c, mip)
    b1f = (b1 * bn_scale + bn_shift).reshape(1, mip).astype(jnp.float32)
    wh_t = wh.T.astype(jnp.float32)                                   # (mip, oup)
    bh_r = bh.reshape(1, oup).astype(jnp.float32)
    ww_t = ww.T.astype(jnp.float32)                                   # (mip, oup)
    bw_r = bw.reshape(1, oup).astype(jnp.float32)

    # Channels-last so the kernel's big load/store is lane-dense over C.
    x_nhwc = jnp.transpose(x, (0, 2, 3, 1))                           # (n, h, w, c)

    per_batch_bytes = h * w * c * x.dtype.itemsize
    bt = _pick_block_batch(n, per_batch_bytes, block_budget_bytes)
    grid = (n // bt,)

    def full_spec(arr):
        nd = arr.ndim
        return pl.BlockSpec(arr.shape, lambda b, _nd=nd: (0,) * _nd)

    grid_spec = pltpu.PrefetchScalarGridSpec(
        num_scalar_prefetch=0,
        grid=grid,
        in_specs=[
            pl.BlockSpec((bt, h, w, c), lambda b: (b, 0, 0, 0)),
            full_spec(w1f), full_spec(b1f),
            full_spec(wh_t), full_spec(bh_r),
            full_spec(ww_t), full_spec(bw_r),
        ],
        out_specs=pl.BlockSpec((bt, h, w, c), lambda b: (b, 0, 0, 0)),
    )

    out_nhwc = pl.pallas_call(
        coord_attn_kernel,
        out_shape=jax.ShapeDtypeStruct((n, h, w, c), x.dtype),
        grid_spec=grid_spec,
        compiler_params=pltpu.CompilerParams(
            dimension_semantics=("parallel",),
            vmem_limit_bytes=48 << 20),
    )(x_nhwc, w1f, b1f, wh_t, bh_r, ww_t, bw_r)

    return jnp.transpose(out_nhwc, (0, 3, 1, 2))                      # back to NCHW


def init_params(key, inp, oup, reduction=32):
    """Deterministic synthetic parameters matching the PyTorch module's shapes
    (BN already reduced to inference-mode scale/shift)."""
    mip = max(8, inp // reduction)
    ks = jax.random.split(key, 10)
    w1 = jax.random.normal(ks[0], (mip, inp), jnp.float32) * 0.3
    b1 = jax.random.normal(ks[1], (mip,), jnp.float32) * 0.1
    gamma = jax.random.uniform(ks[2], (mip,), jnp.float32, minval=0.5, maxval=1.5)
    beta = jax.random.normal(ks[3], (mip,), jnp.float32) * 0.1
    running_mean = jax.random.normal(ks[4], (mip,), jnp.float32) * 0.1
    running_var = jax.random.uniform(ks[5], (mip,), jnp.float32, minval=0.5, maxval=1.5)
    wh = jax.random.normal(ks[6], (oup, mip), jnp.float32) * 0.3
    bh = jax.random.normal(ks[7], (oup,), jnp.float32) * 0.1
    ww = jax.random.normal(ks[8], (oup, mip), jnp.float32) * 0.3
    bw = jax.random.normal(ks[9], (oup,), jnp.float32) * 0.1

    eps = 1e-5
    bn_scale = gamma / jnp.sqrt(running_var + eps)        # (mip,)
    bn_shift = beta - running_mean * bn_scale             # (mip,)
    return (w1, b1, bn_scale, bn_shift, wh, bh, ww, bw)


def reference(x, w1, b1, bn_scale, bn_shift, wh, bh, ww, bw):
    """Pure-JAX reference of the PyTorch forward (inference-mode BN), NCHW."""
    n, c, h, w = x.shape
    x_h = x.mean(axis=3)                                  # (n, c, h)
    x_w = x.mean(axis=2)                                  # (n, c, w)
    y = jnp.concatenate([x_h, x_w], axis=2)               # (n, c, h+w)
    y = jnp.einsum('mc,ncl->nml', w1, y) + b1[None, :, None]
    y = y * bn_scale[None, :, None] + bn_shift[None, :, None]
    y = y * jnp.clip(y + 3.0, 0.0, 6.0) / 6.0
    yh, yw = y[:, :, :h], y[:, :, h:]
    a_h = jax.nn.sigmoid(jnp.einsum('om,nml->nol', wh, yh) + bh[None, :, None])
    a_w = jax.nn.sigmoid(jnp.einsum('om,nml->nol', ww, yw) + bw[None, :, None])
    return x * a_h[:, :, :, None] * a_w[:, :, None, :]


if __name__ == "__main__":
    n, c, h, w = 2, 4, 16, 16
    oup = c  # required for the final broadcast multiply, same as the PyTorch usage

    key = jax.random.PRNGKey(0)
    kx, kp = jax.random.split(key)
    x = jax.random.normal(kx, (n, c, h, w), jnp.float32)
    params = init_params(kp, c, oup)

    out = coordinate_attention(x, *params)
    out = jax.block_until_ready(out)

    ref = reference(x, *params)
    np.testing.assert_allclose(np.asarray(out), np.asarray(ref), rtol=1e-5, atol=1e-5)

    print("KERNEL_OK")
</pallas_src>

<mosaic_0001>
module attributes {stable_mosaic.version = 11 : i64} {
  func.func @coord_attn_kernel(%arg0: i32, %arg1: memref<1x16x16x4xf32, #tpu.memory_space<vmem>>, %arg2: memref<4x8xf32, #tpu.memory_space<vmem>>, %arg3: memref<1x8xf32, #tpu.memory_space<vmem>>, %arg4: memref<8x4xf32, #tpu.memory_space<vmem>>, %arg5: memref<1x4xf32, #tpu.memory_space<vmem>>, %arg6: memref<8x4xf32, #tpu.memory_space<vmem>>, %arg7: memref<1x4xf32, #tpu.memory_space<vmem>>, %arg8: memref<1x16x16x4xf32, #tpu.memory_space<vmem>>) attributes {dimension_semantics = [#tpu.dimension_semantics<parallel>], iteration_bounds = array<i64: 2>, scalar_prefetch = 0 : i64, scratch_operands = 0 : i64, tpu.core_type = #tpu.core_type<tc>, window_params = [{transform_indices = @transform_0, window_bounds = array<i64: 1, 16, 16, 4>}, {pipeline_mode = #tpu.pipeline_mode<synchronous>, transform_indices = @transform_1, window_bounds = array<i64: 4, 8>}, {pipeline_mode = #tpu.pipeline_mode<synchronous>, transform_indices = @transform_2, window_bounds = array<i64: 1, 8>}, {pipeline_mode = #tpu.pipeline_mode<synchronous>, transform_indices = @transform_3, window_bounds = array<i64: 8, 4>}, {pipeline_mode = #tpu.pipeline_mode<synchronous>, transform_indices = @transform_4, window_bounds = array<i64: 1, 4>}, {pipeline_mode = #tpu.pipeline_mode<synchronous>, transform_indices = @transform_5, window_bounds = array<i64: 8, 4>}, {pipeline_mode = #tpu.pipeline_mode<synchronous>, transform_indices = @transform_6, window_bounds = array<i64: 1, 4>}, {transform_indices = @transform_7, window_bounds = array<i64: 1, 16, 16, 4>}]} {
    %c0 = arith.constant 0 : index
    %c0_0 = arith.constant 0 : index
    %c0_1 = arith.constant 0 : index
    %c0_2 = arith.constant 0 : index
    %0 = vector.load %arg1[%c0, %c0_0, %c0_1, %c0_2] : memref<1x16x16x4xf32, #tpu.memory_space<vmem>>, vector<1x16x16x4xf32>
    %cst = arith.constant dense<0.000000e+00> : vector<1x16x4xf32>
    %1 = vector.multi_reduction <add>, %0, %cst [2] : vector<1x16x16x4xf32> to vector<1x16x4xf32>
    %cst_3 = arith.constant 1.600000e+01 : f32
    %2 = vector.broadcast %cst_3 : f32 to vector<1x16x4xf32>
    %3 = arith.divf %1, %2 : vector<1x16x4xf32>
    %cst_4 = arith.constant dense<0.000000e+00> : vector<1x16x4xf32>
    %4 = vector.multi_reduction <add>, %0, %cst_4 [1] : vector<1x16x16x4xf32> to vector<1x16x4xf32>
    %cst_5 = arith.constant 1.600000e+01 : f32
    %5 = vector.broadcast %cst_5 : f32 to vector<1x16x4xf32>
    %6 = arith.divf %4, %5 : vector<1x16x4xf32>
    %c0_6 = arith.constant 0 : index
    %c0_7 = arith.constant 0 : index
    %7 = vector.load %arg2[%c0_6, %c0_7] : memref<4x8xf32, #tpu.memory_space<vmem>>, vector<4x8xf32>
    %c0_8 = arith.constant 0 : index
    %c0_9 = arith.constant 0 : index
    %8 = vector.load %arg3[%c0_8, %c0_9] : memref<1x8xf32, #tpu.memory_space<vmem>>, vector<1x8xf32>
    %c0_10 = arith.constant 0 : index
    %c0_11 = arith.constant 0 : index
    %9 = vector.load %arg4[%c0_10, %c0_11] : memref<8x4xf32, #tpu.memory_space<vmem>>, vector<8x4xf32>
    %c0_12 = arith.constant 0 : index
    %c0_13 = arith.constant 0 : index
    %10 = vector.load %arg5[%c0_12, %c0_13] : memref<1x4xf32, #tpu.memory_space<vmem>>, vector<1x4xf32>
    "tpu.trace_start"() <{level = 10 : i32, message = "blc,cm->blm"}> : () -> ()
    %cst_14 = arith.constant dense<0.000000e+00> : vector<1x16x8xf32>
    %11 = tpu.matmul %3, %7, %cst_14 {dimension_numbers = #tpu.dot_dimension_numbers<[2], [0], [0, 1], [1], [0, 0, 0, 1, 1, 1], [], []>} : vector<1x16x4xf32>, vector<4x8xf32>, vector<1x16x8xf32> -> vector<1x16x8xf32>
    "tpu.trace_stop"() : () -> ()
    %12 = vector.shape_cast %8 : vector<1x8xf32> to vector<1x1x8xf32>
    %13 = vector.broadcast %12 : vector<1x1x8xf32> to vector<1x16x8xf32>
    %14 = arith.addf %11, %13 : vector<1x16x8xf32>
    %cst_15 = arith.constant 3.000000e+00 : f32
    %15 = vector.broadcast %cst_15 : f32 to vector<1x16x8xf32>
    %16 = arith.addf %14, %15 : vector<1x16x8xf32>
    %cst_16 = arith.constant 0.000000e+00 : f32
    %cst_17 = arith.constant 6.000000e+00 : f32
    %17 = vector.broadcast %cst_16 : f32 to vector<1x16x8xf32>
    %18 = arith.maximumf %17, %16 : vector<1x16x8xf32>
    %19 = vector.broadcast %cst_17 : f32 to vector<1x16x8xf32>
    %20 = arith.minimumf %19, %18 : vector<1x16x8xf32>
    %21 = arith.mulf %14, %20 : vector<1x16x8xf32>
    %cst_18 = arith.constant 0.166666672 : f32
    %22 = vector.broadcast %cst_18 : f32 to vector<1x16x8xf32>
    %23 = arith.mulf %21, %22 : vector<1x16x8xf32>
    "tpu.trace_start"() <{level = 10 : i32, message = "blm,mo->blo"}> : () -> ()
    %cst_19 = arith.constant dense<0.000000e+00> : vector<1x16x4xf32>
    %24 = tpu.matmul %23, %9, %cst_19 {dimension_numbers = #tpu.dot_dimension_numbers<[2], [0], [0, 1], [1], [0, 0, 0, 1, 1, 1], [], []>} : vector<1x16x8xf32>, vector<8x4xf32>, vector<1x16x4xf32> -> vector<1x16x4xf32>
    "tpu.trace_stop"() : () -> ()
    %25 = vector.shape_cast %10 : vector<1x4xf32> to vector<1x1x4xf32>
    %26 = vector.broadcast %25 : vector<1x1x4xf32> to vector<1x16x4xf32>
    %27 = arith.addf %24, %26 : vector<1x16x4xf32>
    %28 = arith.negf %27 : vector<1x16x4xf32>
    %29 = math.exp %28 : vector<1x16x4xf32>
    %cst_20 = arith.constant 1.000000e+00 : f32
    %30 = vector.broadcast %cst_20 : f32 to vector<1x16x4xf32>
    %31 = arith.addf %30, %29 : vector<1x16x4xf32>
    %32 = arith.divf %30, %31 : vector<1x16x4xf32>
    %c0_21 = arith.constant 0 : index
    %c0_22 = arith.constant 0 : index
    %33 = vector.load %arg6[%c0_21, %c0_22] : memref<8x4xf32, #tpu.memory_space<vmem>>, vector<8x4xf32>
    %c0_23 = arith.constant 0 : index
    %c0_24 = arith.constant 0 : index
    %34 = vector.load %arg7[%c0_23, %c0_24] : memref<1x4xf32, #tpu.memory_space<vmem>>, vector<1x4xf32>
    "tpu.trace_start"() <{level = 10 : i32, message = "blc,cm->blm"}> : () -> ()
    %cst_25 = arith.constant dense<0.000000e+00> : vector<1x16x8xf32>
    %35 = tpu.matmul %6, %7, %cst_25 {dimension_numbers = #tpu.dot_dimension_numbers<[2], [0], [0, 1], [1], [0, 0, 0, 1, 1, 1], [], []>} : vector<1x16x4xf32>, vector<4x8xf32>, vector<1x16x8xf32> -> vector<1x16x8xf32>
    "tpu.trace_stop"() : () -> ()
    %36 = vector.shape_cast %8 : vector<1x8xf32> to vector<1x1x8xf32>
    %37 = vector.broadcast %36 : vector<1x1x8xf32> to vector<1x16x8xf32>
    %38 = arith.addf %35, %37 : vector<1x16x8xf32>
    %cst_26 = arith.constant 3.000000e+00 : f32
    %39 = vector.broadcast %cst_26 : f32 to vector<1x16x8xf32>
    %40 = arith.addf %38, %39 : vector<1x16x8xf32>
    %cst_27 = arith.constant 0.000000e+00 : f32
    %cst_28 = arith.constant 6.000000e+00 : f32
    %41 = vector.broadcast %cst_27 : f32 to vector<1x16x8xf32>
    %42 = arith.maximumf %41, %40 : vector<1x16x8xf32>
    %43 = vector.broadcast %cst_28 : f32 to vector<1x16x8xf32>
    %44 = arith.minimumf %43, %42 : vector<1x16x8xf32>
    %45 = arith.mulf %38, %44 : vector<1x16x8xf32>
    %cst_29 = arith.constant 0.166666672 : f32
    %46 = vector.broadcast %cst_29 : f32 to vector<1x16x8xf32>
    %47 = arith.mulf %45, %46 : vector<1x16x8xf32>
    "tpu.trace_start"() <{level = 10 : i32, message = "blm,mo->blo"}> : () -> ()
    %cst_30 = arith.constant dense<0.000000e+00> : vector<1x16x4xf32>
    %48 = tpu.matmul %47, %33, %cst_30 {dimension_numbers = #tpu.dot_dimension_numbers<[2], [0], [0, 1], [1], [0, 0, 0, 1, 1, 1], [], []>} : vector<1x16x8xf32>, vector<8x4xf32>, vector<1x16x4xf32> -> vector<1x16x4xf32>
    "tpu.trace_stop"() : () -> ()
    %49 = vector.shape_cast %34 : vector<1x4xf32> to vector<1x1x4xf32>
    %50 = vector.broadcast %49 : vector<1x1x4xf32> to vector<1x16x4xf32>
    %51 = arith.addf %48, %50 : vector<1x16x4xf32>
    %52 = arith.negf %51 : vector<1x16x4xf32>
    %53 = math.exp %52 : vector<1x16x4xf32>
    %cst_31 = arith.constant 1.000000e+00 : f32
    %54 = vector.broadcast %cst_31 : f32 to vector<1x16x4xf32>
    %55 = arith.addf %54, %53 : vector<1x16x4xf32>
    %56 = arith.divf %54, %55 : vector<1x16x4xf32>
    %57 = vector.shape_cast %32 : vector<1x16x4xf32> to vector<1x16x1x4xf32>
    %58 = vector.broadcast %57 : vector<1x16x1x4xf32> to vector<1x16x16x4xf32>
    %59 = arith.mulf %0, %58 : vector<1x16x16x4xf32>
    %60 = vector.shape_cast %56 : vector<1x16x4xf32> to vector<1x1x16x4xf32>
    %61 = vector.broadcast %60 : vector<1x1x16x4xf32> to vector<1x16x16x4xf32>
    %62 = arith.mulf %59, %61 : vector<1x16x16x4xf32>
    %c0_32 = arith.constant 0 : index
    %c0_33 = arith.constant 0 : index
    %c0_34 = arith.constant 0 : index
    %c0_35 = arith.constant 0 : index
    %63 = vector.load %arg8[%c0_32, %c0_33, %c0_34, %c0_35] : memref<1x16x16x4xf32, #tpu.memory_space<vmem>>, vector<1x16x16x4xf32>
    tpu.vector_store %arg8[%c0_32, %c0_33, %c0_34, %c0_35], %62 {strides = array<i32>} : memref<1x16x16x4xf32, #tpu.memory_space<vmem>>, vector<1x16x16x4xf32>,
    return
  }
  func.func @transform_0(%arg0: i32) -> (i32, i32, i32, i32) {
    %c0_i32 = arith.constant 0 : i32
    %c0_i32_0 = arith.constant 0 : i32
    %c0_i32_1 = arith.constant 0 : i32
    %c0_i32_2 = arith.constant 0 : i32
    return %arg0, %c0_i32, %c0_i32_0, %c0_i32_1 : i32, i32, i32, i32
  }
  func.func @transform_1(%arg0: i32) -> (i32, i32) {
    %c0_i32 = arith.constant 0 : i32
    %c0_i32_0 = arith.constant 0 : i32
    %c0_i32_1 = arith.constant 0 : i32
    return %c0_i32, %c0_i32_0 : i32, i32
  }
  func.func @transform_2(%arg0: i32) -> (i32, i32) {
    %c0_i32 = arith.constant 0 : i32
    %c0_i32_0 = arith.constant 0 : i32
    %c0_i32_1 = arith.constant 0 : i32
    return %c0_i32, %c0_i32_0 : i32, i32
  }
  func.func @transform_3(%arg0: i32) -> (i32, i32) {
    %c0_i32 = arith.constant 0 : i32
    %c0_i32_0 = arith.constant 0 : i32
    %c0_i32_1 = arith.constant 0 : i32
    return %c0_i32, %c0_i32_0 : i32, i32
  }
  func.func @transform_4(%arg0: i32) -> (i32, i32) {
    %c0_i32 = arith.constant 0 : i32
    %c0_i32_0 = arith.constant 0 : i32
    %c0_i32_1 = arith.constant 0 : i32
    return %c0_i32, %c0_i32_0 : i32, i32
  }
  func.func @transform_5(%arg0: i32) -> (i32, i32) {
    %c0_i32 = arith.constant 0 : i32
    %c0_i32_0 = arith.constant 0 : i32
    %c0_i32_1 = arith.constant 0 : i32
    return %c0_i32, %c0_i32_0 : i32, i32
  }
  func.func @transform_6(%arg0: i32) -> (i32, i32) {
    %c0_i32 = arith.constant 0 : i32
    %c0_i32_0 = arith.constant 0 : i32
    %c0_i32_1 = arith.constant 0 : i32
    return %c0_i32, %c0_i32_0 : i32, i32
  }
  func.func @transform_7(%arg0: i32) -> (i32, i32, i32, i32) {
    %c0_i32 = arith.constant 0 : i32
    %c0_i32_0 = arith.constant 0 : i32
    %c0_i32_1 = arith.constant 0 : i32
    %c0_i32_2 = arith.constant 0 : i32
    return %arg0, %c0_i32, %c0_i32_0, %c0_i32_1 : i32, i32, i32, i32
  }
}

</mosaic_0001>

<llo_original>
// kernel: tpu_custom_call.1
$region0: #{tpu_custom_call.1}
  #allocation0 [shape = 'u32[]', space=smem, size = 0x4, offset = 0x4, fixed_abs, tag = 'smem constant byte address 0x4 - core index']
  #allocation1 [shape = 'u32[144,128]{1,0:T(1,128)}', space=vmem, size = 0x12000, scoped, tag = 'internal scratch']
  %s0 = inlined_call_operand.vmem [shape: f32[2,16,16,4], index: 0, kind: input, shape index: {}]
  %s1 = inlined_call_operand.vmem [shape: f32[4,8], index: 1, kind: input, shape index: {}]
  %s2 = inlined_call_operand.vmem [shape: f32[1,8], index: 2, kind: input, shape index: {}]
  %s3 = inlined_call_operand.vmem [shape: f32[8,4], index: 3, kind: input, shape index: {}]
  %s4 = inlined_call_operand.vmem [shape: f32[1,4], index: 4, kind: input, shape index: {}]
  %s5 = inlined_call_operand.vmem [shape: f32[8,4], index: 5, kind: input, shape index: {}]
  %s6 = inlined_call_operand.vmem [shape: f32[1,4], index: 6, kind: input, shape index: {}]
  %s7 = inlined_call_operand.vmem [shape: f32[2,16,16,4], index: 7, kind: output, shape index: {}]
  %s8 = sld [smem:[#allocation0]]
  $region61: #{tpu_custom_call.1} parent=0
    _
  %s10 = ssub.s32 1, %s8
  %s11 = scalar_select 0, %s10, %s8
  loop: start=0, step=1, limit=4
  $region2: #{tpu_custom_call.1} parent=0 // loop_pre_header
    _
  $region3: #{tpu_custom_call.1} parent=0 // loop_header
    %s13 = sphi 0, %s17
    %p14 = scmp.ge.s32.totalorder %s13, 4
    %s23 = sphi 0, %s25
    %s26 = sphi 0, %s23
    %s27 = sphi 0, %s26
    %s43 = sphi 0, %s27
    %s47 = sphi 0, %s47
    %s49 = sphi 0, %s47
    %s50 = sphi 0, %s49
    %s64 = sphi 0, %s50
    %s68 = sphi 0, %s68
    %s70 = sphi 0, %s68
    %s71 = sphi 0, %s70
    %s85 = sphi 0, %s71
    %s89 = sphi 0, %s89
    %s91 = sphi 0, %s89
    %s92 = sphi 0, %s91
    %s106 = sphi 0, %s92
    %s110 = sphi 0, %s110
    %s112 = sphi 0, %s110
    %s113 = sphi 0, %s112
    %s127 = sphi 0, %s113
    %s131 = sphi 0, %s131
    %s133 = sphi 0, %s131
    %s134 = sphi 0, %s133
    %s148 = sphi 0, %s134
    %s152 = sphi 0, %s152
    %s154 = sphi 0, %s152
    %s155 = sphi 0, %s154
    %s169 = sphi 0, %s155
    %s175 = sphi 0, %s177
    %s178 = sphi 0, %s175
    %s179 = sphi 0, %s178
    %s195 = sphi 0, %s179
  $region4: #{tpu_custom_call.1} parent=0 // loop_header_branch
    %16 = sbr.rel (%p14) target = $region8
  $region5: #{tpu_custom_call.1} parent=0 // loop_body
    %s18 = ssub.s32 %s13, 1
    %s19 = ssub.s32 %s13, 2
    %s20 = sadd.s32 %s13, 1
    %s21 = ssub.s32 %s13, %s20
    %p22 = scmp.eq.s32.totalorder %s21, 0
    %s24 = sadd.s32 %s23, 1
    %s25 = scalar_select %p22, %s23, %s24
    %p28 = pneg %p22
    %p29 = scmp.eq.s32.totalorder %s13, 1
    %p30 = por %p28, %p29
    %p31 = scmp.ne.s32.totalorder %s23, %s26
    %p32 = scmp.eq.s32.totalorder %s13, 0
    %p33 = por %p31, %p32
    %p34 = scmp.ne.s32.totalorder %s23, %s26
    %p35 = scmp.eq.s32.totalorder %s18, 1
    %p36 = por %p34, %p35
    %p37 = scmp.ne.s32.totalorder %s26, %s27
    %p38 = scmp.eq.s32.totalorder %s18, 0
    %p39 = por %p37, %p38
    %p40 = scmp.ne.s32.totalorder %s26, %s27
    %p41 = scmp.eq.s32.totalorder %s19, 1
    %p42 = por %p40, %p41
    %p44 = scmp.ne.s32.totalorder %s27, %s43
    %p45 = scmp.eq.s32.totalorder %s19, 0
    %p46 = por %p44, %p45
    %s48 = sadd.s32 %s47, 1
    %p51 = scmp.eq.s32.totalorder %s13, 1
    %p52 = scmp.ne.s32.totalorder %s47, %s49
    %p53 = scmp.eq.s32.totalorder %s13, 0
    %p54 = por %p52, %p53
    %p55 = scmp.ne.s32.totalorder %s47, %s49
    %p56 = scmp.eq.s32.totalorder %s18, 1
    %p57 = por %p55, %p56
    %p58 = scmp.ne.s32.totalorder %s49, %s50
    %p59 = scmp.eq.s32.totalorder %s18, 0
    %p60 = por %p58, %p59
    %p61 = scmp.ne.s32.totalorder %s49, %s50
    %p62 = scmp.eq.s32.totalorder %s19, 1
    %p63 = por %p61, %p62
    %p65 = scmp.ne.s32.totalorder %s50, %s64
    %p66 = scmp.eq.s32.totalorder %s19, 0
    %p67 = por %p65, %p66
    %s69 = sadd.s32 %s68, 1
    %p72 = scmp.eq.s32.totalorder %s13, 1
    %p73 = scmp.ne.s32.totalorder %s68, %s70
    %p74 = scmp.eq.s32.totalorder %s13, 0
    %p75 = por %p73, %p74
    %p76 = scmp.ne.s32.totalorder %s68, %s70
    %p77 = scmp.eq.s32.totalorder %s18, 1
    %p78 = por %p76, %p77
    %p79 = scmp.ne.s32.totalorder %s70, %s71
    %p80 = scmp.eq.s32.totalorder %s18, 0
    %p81 = por %p79, %p80
    %p82 = scmp.ne.s32.totalorder %s70, %s71
    %p83 = scmp.eq.s32.totalorder %s19, 1
    %p84 = por %p82, %p83
    %p86 = scmp.ne.s32.totalorder %s71, %s85
    %p87 = scmp.eq.s32.totalorder %s19, 0
    %p88 = por %p86, %p87
    %s90 = sadd.s32 %s89, 1
    %p93 = scmp.eq.s32.totalorder %s13, 1
    %p94 = scmp.ne.s32.totalorder %s89, %s91
    %p95 = scmp.eq.s32.totalorder %s13, 0
    %p96 = por %p94, %p95
    %p97 = scmp.ne.s32.totalorder %s89, %s91
    %p98 = scmp.eq.s32.totalorder %s18, 1
    %p99 = por %p97, %p98
    %p100 = scmp.ne.s32.totalorder %s91, %s92
    %p101 = scmp.eq.s32.totalorder %s18, 0
    %p102 = por %p100, %p101
    %p103 = scmp.ne.s32.totalorder %s91, %s92
    %p104 = scmp.eq.s32.totalorder %s19, 1
    %p105 = por %p103, %p104
    %p107 = scmp.ne.s32.totalorder %s92, %s106
    %p108 = scmp.eq.s32.totalorder %s19, 0
    %p109 = por %p107, %p108
    %s111 = sadd.s32 %s110, 1
    %p114 = scmp.eq.s32.totalorder %s13, 1
    %p115 = scmp.ne.s32.totalorder %s110, %s112
    %p116 = scmp.eq.s32.totalorder %s13, 0
    %p117 = por %p115, %p116
    %p118 = scmp.ne.s32.totalorder %s110, %s112
    %p119 = scmp.eq.s32.totalorder %s18, 1
    %p120 = por %p118, %p119
    %p121 = scmp.ne.s32.totalorder %s112, %s113
    %p122 = scmp.eq.s32.totalorder %s18, 0
    %p123 = por %p121, %p122
    %p124 = scmp.ne.s32.totalorder %s112, %s113
    %p125 = scmp.eq.s32.totalorder %s19, 1
    %p126 = por %p124, %p125
    %p128 = scmp.ne.s32.totalorder %s113, %s127
    %p129 = scmp.eq.s32.totalorder %s19, 0
    %p130 = por %p128, %p129
    %s132 = sadd.s32 %s131, 1
    %p135 = scmp.eq.s32.totalorder %s13, 1
    %p136 = scmp.ne.s32.totalorder %s131, %s133
    %p137 = scmp.eq.s32.totalorder %s13, 0
    %p138 = por %p136, %p137
    %p139 = scmp.ne.s32.totalorder %s131, %s133
    %p140 = scmp.eq.s32.totalorder %s18, 1
    %p141 = por %p139, %p140
    %p142 = scmp.ne.s32.totalorder %s133, %s134
    %p143 = scmp.eq.s32.totalorder %s18, 0
    %p144 = por %p142, %p143
    %p145 = scmp.ne.s32.totalorder %s133, %s134
    %p146 = scmp.eq.s32.totalorder %s19, 1
    %p147 = por %p145, %p146
    %p149 = scmp.ne.s32.totalorder %s134, %s148
    %p150 = scmp.eq.s32.totalorder %s19, 0
    %p151 = por %p149, %p150
    %s153 = sadd.s32 %s152, 1
    %p156 = scmp.eq.s32.totalorder %s13, 1
    %p157 = scmp.ne.s32.totalorder %s152, %s154
    %p158 = scmp.eq.s32.totalorder %s13, 0
    %p159 = por %p157, %p158
    %p160 = scmp.ne.s32.totalorder %s152, %s154
    %p161 = scmp.eq.s32.totalorder %s18, 1
    %p162 = por %p160, %p161
    %p163 = scmp.ne.s32.totalorder %s154, %s155
    %p164 = scmp.eq.s32.totalorder %s18, 0
    %p165 = por %p163, %p164
    %p166 = scmp.ne.s32.totalorder %s154, %s155
    %p167 = scmp.eq.s32.totalorder %s19, 1
    %p168 = por %p166, %p167
    %p170 = scmp.ne.s32.totalorder %s155, %s169
    %p171 = scmp.eq.s32.totalorder %s19, 0
    %p172 = por %p170, %p171
    %s173 = ssub.s32 %s13, %s20
    %p174 = scmp.eq.s32.totalorder %s173, 0
    %s176 = sadd.s32 %s175, 1
    %s177 = scalar_select %p174, %s175, %s176
    %p180 = pneg %p174
    %p181 = scmp.eq.s32.totalorder %s13, 1
    %p182 = por %p180, %p181
    %p183 = scmp.ne.s32.totalorder %s175, %s178
    %p184 = scmp.eq.s32.totalorder %s13, 0
    %p185 = por %p183, %p184
    %p186 = scmp.ne.s32.totalorder %s175, %s178
    %p187 = scmp.eq.s32.totalorder %s18, 1
    %p188 = por %p186, %p187
    %p189 = scmp.ne.s32.totalorder %s178, %s179
    %p190 = scmp.eq.s32.totalorder %s18, 0
    %p191 = por %p189, %p190
    %p192 = scmp.ne.s32.totalorder %s178, %s179
    %p193 = scmp.eq.s32.totalorder %s19, 1
    %p194 = por %p192, %p193
    %p196 = scmp.ne.s32.totalorder %s179, %s195
    %p197 = scmp.eq.s32.totalorder %s19, 0
    %p198 = por %p196, %p197
    %p199 = scmp.le.s32.totalorder 1, %s13
    %p200 = scmp.lt.s32.totalorder %s13, 3
    %p201 = pnand %p199, %p200
    %p202 = pneg %p201
    // Predicated region
    $region9: #{tpu_custom_call.1} parent=5 // pred_check
      _
    $region10: #{tpu_custom_call.1} parent=5 // pred_check_branch
      %204 = sbr.rel (%p201) target = $region12
    $region11: #{tpu_custom_call.1} parent=5 // pred_region
      %s205 = ssub.s32 %s13, 1
      // Predicated region
      $region13: #{tpu_custom_call.1} parent=11 // pred_check
        %p206 = pneg %p60
      $region14: #{tpu_custom_call.1} parent=11 // pred_check_branch
        %208 = sbr.rel (%p206) target = $region16
      $region15: #{tpu_custom_call.1} parent=11 // pred_region
        _
      $region16: #{tpu_custom_call.1} parent=11 // pred_fallthru
        _
      // Predicated region
      $region17: #{tpu_custom_call.1} parent=11 // pred_check
        %p209 = pneg %p81
      $region18: #{tpu_custom_call.1} parent=11 // pred_check_branch
        %211 = sbr.rel (%p209) target = $region20
      $region19: #{tpu_custom_call.1} parent=11 // pred_region
        _
      $region20: #{tpu_custom_call.1} parent=11 // pred_fallthru
        _
      // Predicated region
      $region21: #{tpu_custom_call.1} parent=11 // pred_check
        %p212 = pneg %p102
      $region22: #{tpu_custom_call.1} parent=11 // pred_check_branch
        %214 = sbr.rel (%p212) target = $region24
      $region23: #{tpu_custom_call.1} parent=11 // pred_region
        _
      $region24: #{tpu_custom_call.1} parent=11 // pred_fallthru
        _
      // Predicated region
      $region25: #{tpu_custom_call.1} parent=11 // pred_check
        %p215 = pneg %p123
      $region26: #{tpu_custom_call.1} parent=11 // pred_check_branch
        %217 = sbr.rel (%p215) target = $region28
      $region27: #{tpu_custom_call.1} parent=11 // pred_region
        _
      $region28: #{tpu_custom_call.1} parent=11 // pred_fallthru
        _
      // Predicated region
      $region29: #{tpu_custom_call.1} parent=11 // pred_check
        %p218 = pneg %p144
      $region30: #{tpu_custom_call.1} parent=11 // pred_check_branch
        %220 = sbr.rel (%p218) target = $region32
      $region31: #{tpu_custom_call.1} parent=11 // pred_region
        _
      $region32: #{tpu_custom_call.1} parent=11 // pred_fallthru
        _
      // Predicated region
      $region33: #{tpu_custom_call.1} parent=11 // pred_check
        %p221 = pneg %p165
      $region34: #{tpu_custom_call.1} parent=11 // pred_check_branch
        %223 = sbr.rel (%p221) target = $region36
      $region35: #{tpu_custom_call.1} parent=11 // pred_region
        _
      $region36: #{tpu_custom_call.1} parent=11 // pred_fallthru
        _
    $region12: #{tpu_custom_call.1} parent=5 // pred_fallthru
      _
    %p224 = scmp.lt.s32.totalorder %s13, 2
    // Predicated region
    $region37: #{tpu_custom_call.1} parent=5 // pred_check
      %p225 = pneg %p224
    $region38: #{tpu_custom_call.1} parent=5 // pred_check_branch
      %227 = sbr.rel (%p225) target = $region40
    $region39: #{tpu_custom_call.1} parent=5 // pred_region
      // Predicated region
      $region41: #{tpu_custom_call.1} parent=39 // pred_check
        %p228 = pneg %p33
      $region42: #{tpu_custom_call.1} parent=39 // pred_check_branch
        %230 = sbr.rel (%p228) target = $region44
      $region43: #{tpu_custom_call.1} parent=39 // pred_region
        %p231 = scmp.lt.s32.totalorder %s13, 1
        %s232 = scalar_select %p231, %s13, 1
        %s233 = smul.addr %s232, 32
        %s234 = smul.addr %s233, 8
        %s235 = scalar_lea.vmem %s0, %s234
      $region44: #{tpu_custom_call.1} parent=39 // pred_fallthru
        _
    $region40: #{tpu_custom_call.1} parent=5 // pred_fallthru
      _
    %p236 = scmp.le.s32.totalorder 1, %s13
    %p237 = scmp.lt.s32.totalorder %s13, 3
    %p238 = pnand %p236, %p237
    %p239 = pneg %p238
    // Predicated region
    $region45: #{tpu_custom_call.1} parent=5 // pred_check
      _
    $region46: #{tpu_custom_call.1} parent=5 // pred_check_branch
      %241 = sbr.rel (%p238) target = $region48
    $region47: #{tpu_custom_call.1} parent=5 // pred_region
      %s242 = ssub.s32 %s13, 1
      %p243 = scmp.lt.s32.totalorder %s18, 1
      %s244 = scalar_select %p243, %s18, 1
      %s245 = smul.addr %s244, 32
      %s246 = smul.addr %s245, 8
      %s247 = scalar_lea.vmem %s0, %s246
      %p248 = pneg %p39
      %p249 = pneg %p36
      %p250 = pneg %p60
      %p251 = pneg %p57
      %p252 = pneg %p81
      %p253 = pneg %p78
      %p254 = pneg %p102
      %p255 = pneg %p99
      %p256 = pneg %p123
      %p257 = pneg %p120
      %p258 = pneg %p144
      %p259 = pneg %p141
      %p260 = pneg %p165
      %p261 = pneg %p162
      %p262 = pneg %p191
      %p263 = pneg %p188
      %p264 = scmp.lt.s32.totalorder %s18, 1
      %s265 = scalar_select %p264, %s18, 1
      %s266 = smul.addr %s265, 32
      %s267 = smul.addr %s266, 8
      %s268 = scalar_lea.vmem %s7, %s267
      %p269 = scmp.lt.s32.totalorder %s18, 1
      %s270 = scalar_select %p269, %s18, 1
      %s271 = smul.addr %s270, 32
      %s272 = smul.addr %s271, 8
      %s273 = scalar_lea.vmem %s0, %s272
      %p274 = scmp.lt.s32.totalorder %s18, 1
      %s275 = scalar_select %p274, %s18, 1
      %s276 = smul.addr %s275, 32
      %s277 = smul.addr %s276, 8
      %s278 = scalar_lea.vmem %s7, %s277
      %v279 = vld [vmem:[%s273] sm:$0xff]
      %v280 = vld [vmem:[%s273 + $0x8] sm:$0xff]
      %v281 = vld [vmem:[%s273 + $0x10] sm:$0xff]
      %v282 = vld [vmem:[%s273 + $0x18] sm:$0xff]
      %v283 = vld [vmem:[%s273 + $0x20] sm:$0xff]
      %v284 = vld [vmem:[%s273 + $0x28] sm:$0xff]
      %v285 = vld [vmem:[%s273 + $0x30] sm:$0xff]
      %v286 = vld [vmem:[%s273 + $0x38] sm:$0xff]
      %v287 = vld [vmem:[%s273 + $0x40] sm:$0xff]
      %v288 = vld [vmem:[%s273 + $0x48] sm:$0xff]
      %v289 = vld [vmem:[%s273 + $0x50] sm:$0xff]
      %v290 = vld [vmem:[%s273 + $0x58] sm:$0xff]
      %v291 = vld [vmem:[%s273 + $0x60] sm:$0xff]
      %v292 = vld [vmem:[%s273 + $0x68] sm:$0xff]
      %v293 = vld [vmem:[%s273 + $0x70] sm:$0xff]
      %v294 = vld [vmem:[%s273 + $0x78] sm:$0xff]
      %v295 = vld [vmem:[%s273 + $0x80] sm:$0xff]
      %v296 = vld [vmem:[%s273 + $0x88] sm:$0xff]
      %v297 = vld [vmem:[%s273 + $0x90] sm:$0xff]
      %v298 = vld [vmem:[%s273 + $0x98] sm:$0xff]
      %v299 = vld [vmem:[%s273 + $0xa0] sm:$0xff]
      %v300 = vld [vmem:[%s273 + $0xa8] sm:$0xff]
      %v301 = vld [vmem:[%s273 + $0xb0] sm:$0xff]
      %v302 = vld [vmem:[%s273 + $0xb8] sm:$0xff]
      %v303 = vld [vmem:[%s273 + $0xc0] sm:$0xff]
      %v304 = vld [vmem:[%s273 + $0xc8] sm:$0xff]
      %v305 = vld [vmem:[%s273 + $0xd0] sm:$0xff]
      %v306 = vld [vmem:[%s273 + $0xd8] sm:$0xff]
      %v307 = vld [vmem:[%s273 + $0xe0] sm:$0xff]
      %v308 = vld [vmem:[%s273 + $0xe8] sm:$0xff]
      %v309 = vld [vmem:[%s273 + $0xf0] sm:$0xff]
      %v310 = vld [vmem:[%s273 + $0xf8] sm:$0xff]
      %vm311 = vcmask 31744
      %v312 = vsel %vm311, %v279, 0.0
      %v313 = vsel %vm311, %v280, 0.0
      %v314 = vadd.f32 %v312, %v313
      %v315 = vrot.slane %v314, 4
      %v316 = vadd.f32 %v314, %v315
      %v317 = vrot.slane %v316, 2
      %v318 = vadd.f32 %v316, %v317
      %v319 = vrot.slane %v318, 1
      %v320 = vadd.f32 %v318, %v319
      %v321 = vsel %vm311, %v281, 0.0
      %v322 = vsel %vm311, %v282, 0.0
      %v323 = vadd.f32 %v321, %v322
      %v324 = vrot.slane %v323, 4
      %v325 = vadd.f32 %v323, %v324
      %v326 = vrot.slane %v325, 2
      %v327 = vadd.f32 %v325, %v326
      %v328 = vrot.slane %v327, 1
      %v329 = vadd.f32 %v327, %v328
      %v330 = vsel %vm311, %v283, 0.0
      %v331 = vsel %vm311, %v284, 0.0
      %v332 = vadd.f32 %v330, %v331
      %v333 = vrot.slane %v332, 4
      %v334 = vadd.f32 %v332, %v333
      %v335 = vrot.slane %v334, 2
      %v336 = vadd.f32 %v334, %v335
      %v337 = vrot.slane %v336, 1
      %v338 = vadd.f32 %v336, %v337
      %v339 = vsel %vm311, %v285, 0.0
      %v340 = vsel %vm311, %v286, 0.0
      %v341 = vadd.f32 %v339, %v340
      %v342 = vrot.slane %v341, 4
      %v343 = vadd.f32 %v341, %v342
      %v344 = vrot.slane %v343, 2
      %v345 = vadd.f32 %v343, %v344
      %v346 = vrot.slane %v345, 1
      %v347 = vadd.f32 %v345, %v346
      %v348 = vsel %vm311, %v287, 0.0
      %v349 = vsel %vm311, %v288, 0.0
      %v350 = vadd.f32 %v348, %v349
      %v351 = vrot.slane %v350, 4
      %v352 = vadd.f32 %v350, %v351
      %v353 = vrot.slane %v352, 2
      %v354 = vadd.f32 %v352, %v353
      %v355 = vrot.slane %v354, 1
      %v356 = vadd.f32 %v354, %v355
      %v357 = vsel %vm311, %v289, 0.0
      %v358 = vsel %vm311, %v290, 0.0
      %v359 = vadd.f32 %v357, %v358
      %v360 = vrot.slane %v359, 4
      %v361 = vadd.f32 %v359, %v360
      %v362 = vrot.slane %v361, 2
      %v363 = vadd.f32 %v361, %v362
      %v364 = vrot.slane %v363, 1
      %v365 = vadd.f32 %v363, %v364
      %v366 = vsel %vm311, %v291, 0.0
      %v367 = vsel %vm311, %v292, 0.0
      %v368 = vadd.f32 %v366, %v367
      %v369 = vrot.slane %v368, 4
      %v370 = vadd.f32 %v368, %v369
      %v371 = vrot.slane %v370, 2
      %v372 = vadd.f32 %v370, %v371
      %v373 = vrot.slane %v372, 1
      %v374 = vadd.f32 %v372, %v373
      %v375 = vsel %vm311, %v293, 0.0
      %v376 = vsel %vm311, %v294, 0.0
      %v377 = vadd.f32 %v375, %v376
      %v378 = vrot.slane %v377, 4
      %v379 = vadd.f32 %v377, %v378
      %v380 = vrot.slane %v379, 2
      %v381 = vadd.f32 %v379, %v380
      %v382 = vrot.slane %v381, 1
      %v383 = vadd.f32 %v381, %v382
      %v384 = vsel %vm311, %v295, 0.0
      %v385 = vsel %vm311, %v296, 0.0
      %v386 = vadd.f32 %v384, %v385
      %v387 = vrot.slane %v386, 4
      %v388 = vadd.f32 %v386, %v387
      %v389 = vrot.slane %v388, 2
      %v390 = vadd.f32 %v388, %v389
      %v391 = vrot.slane %v390, 1
      %v392 = vadd.f32 %v390, %v391
      %v393 = vsel %vm311, %v297, 0.0
      %v394 = vsel %vm311, %v298, 0.0
      %v395 = vadd.f32 %v393, %v394
      %v396 = vrot.slane %v395, 4
      %v397 = vadd.f32 %v395, %v396
      %v398 = vrot.slane %v397, 2
      %v399 = vadd.f32 %v397, %v398
      %v400 = vrot.slane %v399, 1
      %v401 = vadd.f32 %v399, %v400
      %v402 = vsel %vm311, %v299, 0.0
      %v403 = vsel %vm311, %v300, 0.0
      %v404 = vadd.f32 %v402, %v403
      %v405 = vrot.slane %v404, 4
      %v406 = vadd.f32 %v404, %v405
      %v407 = vrot.slane %v406, 2
      %v408 = vadd.f32 %v406, %v407
      %v409 = vrot.slane %v408, 1
      %v410 = vadd.f32 %v408, %v409
      %v411 = vsel %vm311, %v301, 0.0
      %v412 = vsel %vm311, %v302, 0.0
      %v413 = vadd.f32 %v411, %v412
      %v414 = vrot.slane %v413, 4
      %v415 = vadd.f32 %v413, %v414
      %v416 = vrot.slane %v415, 2
      %v417 = vadd.f32 %v415, %v416
      %v418 = vrot.slane %v417, 1
      %v419 = vadd.f32 %v417, %v418
      %v420 = vsel %vm311, %v303, 0.0
      %v421 = vsel %vm311, %v304, 0.0
      %v422 = vadd.f32 %v420, %v421
      %v423 = vrot.slane %v422, 4
      %v424 = vadd.f32 %v422, %v423
      %v425 = vrot.slane %v424, 2
      %v426 = vadd.f32 %v424, %v425
      %v427 = vrot.slane %v426, 1
      %v428 = vadd.f32 %v426, %v427
      %v429 = vsel %vm311, %v305, 0.0
      %v430 = vsel %vm311, %v306, 0.0
      %v431 = vadd.f32 %v429, %v430
      %v432 = vrot.slane %v431, 4
      %v433 = vadd.f32 %v431, %v432
      %v434 = vrot.slane %v433, 2
      %v435 = vadd.f32 %v433, %v434
      %v436 = vrot.slane %v435, 1
      %v437 = vadd.f32 %v435, %v436
      %v438 = vsel %vm311, %v307, 0.0
      %v439 = vsel %vm311, %v308, 0.0
      %v440 = vadd.f32 %v438, %v439
      %v441 = vrot.slane %v440, 4
      %v442 = vadd.f32 %v440, %v441
      %v443 = vrot.slane %v442, 2
      %v444 = vadd.f32 %v442, %v443
      %v445 = vrot.slane %v444, 1
      %v446 = vadd.f32 %v444, %v445
      %v447 = vsel %vm311, %v309, 0.0
      %v448 = vsel %vm311, %v310, 0.0
      %v449 = vadd.f32 %v447, %v448
      %v450 = vrot.slane %v449, 4
      %v451 = vadd.f32 %v449, %v450
      %v452 = vrot.slane %v451, 2
      %v453 = vadd.f32 %v451, %v452
      %v454 = vrot.slane %v453, 1
      %v455 = vadd.f32 %v453, %v454
      %v456 = vrcp.pop 16.0
      %v457 = vmul.f32 %v320, %v456
      %v458 = vmul.f32 %v329, %v456
      %v459 = vmul.f32 %v338, %v456
      %v460 = vmul.f32 %v347, %v456
      %v461 = vmul.f32 %v356, %v456
      %v462 = vmul.f32 %v365, %v456
      %v463 = vmul.f32 %v374, %v456
      %v464 = vmul.f32 %v383, %v456
      %v465 = vmul.f32 %v392, %v456
      %v466 = vmul.f32 %v401, %v456
      %v467 = vmul.f32 %v410, %v456
      %v468 = vmul.f32 %v419, %v456
      %v469 = vmul.f32 %v428, %v456
      %v470 = vmul.f32 %v437, %v456
      %v471 = vmul.f32 %v446, %v456
      %v472 = vmul.f32 %v455, %v456
      %v473 = vadd.f32 %v312, %v321
      %v474 = vadd.f32 %v473, %v330
      %v475 = vadd.f32 %v474, %v339
      %v476 = vadd.f32 %v475, %v348
      %v477 = vadd.f32 %v476, %v357
      %v478 = vadd.f32 %v477, %v366
      %v479 = vadd.f32 %v478, %v375
      %v480 = vadd.f32 %v479, %v384
      %v481 = vadd.f32 %v480, %v393
      %v482 = vadd.f32 %v481, %v402
      %v483 = vadd.f32 %v482, %v411
      %v484 = vadd.f32 %v483, %v420
      %v485 = vadd.f32 %v484, %v429
      %v486 = vadd.f32 %v485, %v438
      %v487 = vadd.f32 %v486, %v447
      %v488 = vadd.f32 %v313, %v322
      %v489 = vadd.f32 %v488, %v331
      %v490 = vadd.f32 %v489, %v340
      %v491 = vadd.f32 %v490, %v349
      %v492 = vadd.f32 %v491, %v358
      %v493 = vadd.f32 %v492, %v367
      %v494 = vadd.f32 %v493, %v376
      %v495 = vadd.f32 %v494, %v385
      %v496 = vadd.f32 %v495, %v394
      %v497 = vadd.f32 %v496, %v403
      %v498 = vadd.f32 %v497, %v412
      %v499 = vadd.f32 %v498, %v421
      %v500 = vadd.f32 %v499, %v430
      %v501 = vadd.f32 %v500, %v439
      %v502 = vadd.f32 %v501, %v448
      %v503 = vmul.f32 %v487, %v456
      %v504 = vmul.f32 %v502, %v456
      %v505 = vld [vmem:[%s1] sm:$0xf]
      %v506 = vld [vmem:[%s2] sm:$0x1]
      %v507 = vld [vmem:[%s3] sm:$0xff]
      %v508 = vld [vmem:[%s4] sm:$0x1]
      %v510 = vlaneseq
      %v511 = vshrl.u32 %v510, 7
      %v512 = vsub.s32 0, %v511
      %v513 = vrot.slane %v506, %v512
      %vm531 = vcmask 1041409
      %v532 = vsel %vm531, %v458, %v457
      %vm533 = vcmask 1042434
      %v534 = vsel %vm533, %v459, %v532
      %vm535 = vcmask 1043459
      %v536 = vsel %vm535, %v460, %v534
      %vm537 = vcmask 1044484
      %v538 = vsel %vm537, %v461, %v536
      %vm539 = vcmask 1045509
      %v540 = vsel %vm539, %v462, %v538
      %vm541 = vcmask 1046534
      %v542 = vsel %vm541, %v463, %v540
      %vm543 = vcmask 1047559
      %v544 = vsel %vm543, %v464, %v542
      %v545 = vsel %vm531, %v466, %v465
      %v546 = vsel %vm533, %v467, %v545
      %v547 = vsel %vm535, %v468, %v546
      %v548 = vsel %vm537, %v469, %v547
      %v549 = vsel %vm539, %v470, %v548
      %v550 = vsel %vm541, %v471, %v549
      %v551 = vsel %vm543, %v472, %v550
      %v552 = vsel %vm311, %v544, 0
      %v554 = vsel %vm311, %v551, 0
      %vm556 = vcmask 1043456
      %v558 = vsel %vm556, %v505, 0
      %560 = vmatprep.subr.mxu0 0.0
      %561 = vmatpush1.msra.mxu0 %v558
      %562 = vmatprep.subr.mxu0 0.0
      %563 = vmatpush1.msra.mxu0 0.0
      %564 = vmatprep.subr.mxu0 0.0
      %565 = vmatpush1.msra.mxu0 0.0
      %566 = vmatprep.subr.mxu0 0.0
      %567 = vmatpush1.msra.mxu0 0.0
      %568 = vmatprep.subr.mxu0 0.0
      %569 = vmatpush1.msra.mxu0 0.0
      %570 = vmatprep.subr.mxu0 0.0
      %571 = vmatpush1.msra.mxu0 0.0
      %572 = vmatprep.subr.mxu0 0.0
      %573 = vmatpush1.msra.mxu0 0.0
      %574 = vmatprep.subr.mxu0 0.0
      %575 = vmatpush1.msra.mxu0 0.0
      %576 = vmatprep.subr.mxu0 0.0
      %577 = vmatpush1.msra.mxu0 0.0
      %578 = vmatprep.subr.mxu0 0.0
      %579 = vmatpush1.msra.mxu0 0.0
      %580 = vmatprep.subr.mxu0 0.0
      %581 = vmatpush1.msra.mxu0 0.0
      %582 = vmatprep.subr.mxu0 0.0
      %583 = vmatpush1.msra.mxu0 0.0
      %584 = vmatprep.subr.mxu0 0.0
      %585 = vmatpush1.msra.mxu0 0.0
      %586 = vmatprep.subr.mxu0 0.0
      %587 = vmatpush1.msra.mxu0 0.0
      %588 = vmatprep.subr.mxu0 0.0
      %589 = vmatpush1.msra.mxu0 0.0
      %590 = vmatprep.subr.mxu0 0.0
      %591 = vmatpush1.msra.mxu0 0.0
      %592 = vmatprep.subr.mxu0 0.0
      %593 = vmatpush1.msra.mxu0 0.0
      %594 = vmatprep.subr.mxu0 0.0
      %595 = vmatpush1.msra.mxu0 0.0
      %596 = vmatprep.subr.mxu0 0.0
      %597 = vmatpush1.msra.mxu0 0.0
      %598 = vmatprep.subr.mxu0 0.0
      %599 = vmatpush1.msra.mxu0 0.0
      %600 = vmatprep.subr.mxu0 0.0
      %601 = vmatpush1.msra.mxu0 0.0
      %602 = vmatprep.subr.mxu0 0.0
      %603 = vmatpush1.msra.mxu0 0.0
      %604 = vmatprep.subr.mxu0 0.0
      %605 = vmatpush1.msra.mxu0 0.0
      %606 = vmatprep.subr.mxu0 0.0
      %607 = vmatpush1.msra.mxu0 0.0
      %608 = vmatprep.subr.mxu0 0.0
      %609 = vmatpush1.msra.mxu0 0.0
      %610 = vmatprep.subr.mxu0 0.0
      %611 = vmatpush1.msra.mxu0 0.0
      %612 = vmatprep.subr.mxu0 0.0
      %613 = vmatpush1.msra.mxu0 0.0
      %614 = vmatprep.subr.mxu0 0.0
      %615 = vmatpush1.msra.mxu0 0.0
      %616 = vmatprep.subr.mxu0 0.0
      %617 = vmatpush1.msra.mxu0 0.0
      %618 = vmatprep.subr.mxu0 0.0
      %619 = vmatpush1.msra.mxu0 0.0
      %620 = vmatprep.subr.mxu0 0.0
      %621 = vmatpush1.msra.mxu0 0.0
      %622 = vmatprep.subr.mxu0 0.0
      %623 = vmatpush1.msra.mxu0 0.0
      %624 = vmatprep.mubr.f32.mxu0 0.0
      %625 = vmatmul.mubr.f32.gmra.mrb[0].mxu0 %v552
      %v626 = vpop.f32.mrb[0].mxu0
      %v627 = vadd.f32 %v513, %v626
      %v628 = vpop.f32.mrb[0].mxu0
      %629 = vmatprep.mubr.f32.mxu0 0.0
      %630 = vmatmul.mubr.f32.gmra.mrb[0].mxu0 %v554
      %v631 = vpop.f32.mrb[0].mxu0
      %v632 = vadd.f32 %v513, %v631
      %v633 = vpop.f32.mrb[0].mxu0
      %634 = vdwg.mxu0
      %v635 = vadd.f32 %v627, 3.0
      %v636 = vadd.f32 %v632, 3.0
      %v637 = vmax.f32 %v635, 0.0
      %v638 = vmax.f32 %v636, 0.0
      %v639 = vmin.f32 %v637, 6.0
      %v640 = vmin.f32 %v638, 6.0
      %v641 = vmul.f32 %v627, %v639
      %v642 = vmul.f32 %v632, %v640
      %v643 = vmul.f32 %v641, 0.16666667
      %v644 = vmul.f32 %v642, 0.16666667
      %v646 = vlaneseq
      %v647 = vshrl.u32 %v646, 7
      %v648 = vsub.s32 0, %v647
      %v649 = vrot.slane %v508, %v648
      %vm651 = vcmask 64512
      %v653 = vsel %vm651, %v643, 0
      %v656 = vsel %vm651, %v644, 0
      %658 = vmatprep.subr.mxu0 0.0
      %659 = vmatpush1.msra.mxu0 %v507
      %660 = vmatprep.subr.mxu0 0.0
      %661 = vmatpush1.msra.mxu0 0.0
      %662 = vmatprep.subr.mxu0 0.0
      %663 = vmatpush1.msra.mxu0 0.0
      %664 = vmatprep.subr.mxu0 0.0
      %665 = vmatpush1.msra.mxu0 0.0
      %666 = vmatprep.subr.mxu0 0.0
      %667 = vmatpush1.msra.mxu0 0.0
      %668 = vmatprep.subr.mxu0 0.0
      %669 = vmatpush1.msra.mxu0 0.0
      %670 = vmatprep.subr.mxu0 0.0
      %671 = vmatpush1.msra.mxu0 0.0
      %672 = vmatprep.subr.mxu0 0.0
      %673 = vmatpush1.msra.mxu0 0.0
      %674 = vmatprep.subr.mxu0 0.0
      %675 = vmatpush1.msra.mxu0 0.0
      %676 = vmatprep.subr.mxu0 0.0
      %677 = vmatpush1.msra.mxu0 0.0
      %678 = vmatprep.subr.mxu0 0.0
      %679 = vmatpush1.msra.mxu0 0.0
      %680 = vmatprep.subr.mxu0 0.0
      %681 = vmatpush1.msra.mxu0 0.0
      %682 = vmatprep.subr.mxu0 0.0
      %683 = vmatpush1.msra.mxu0 0.0
      %684 = vmatprep.subr.mxu0 0.0
      %685 = vmatpush1.msra.mxu0 0.0
      %686 = vmatprep.subr.mxu0 0.0
      %687 = vmatpush1.msra.mxu0 0.0
      %688 = vmatprep.subr.mxu0 0.0
      %689 = vmatpush1.msra.mxu0 0.0
      %690 = vmatprep.subr.mxu0 0.0
      %691 = vmatpush1.msra.mxu0 0.0
      %692 = vmatprep.subr.mxu0 0.0
      %693 = vmatpush1.msra.mxu0 0.0
      %694 = vmatprep.subr.mxu0 0.0
      %695 = vmatpush1.msra.mxu0 0.0
      %696 = vmatprep.subr.mxu0 0.0
      %697 = vmatpush1.msra.mxu0 0.0
      %698 = vmatprep.subr.mxu0 0.0
      %699 = vmatpush1.msra.mxu0 0.0
      %700 = vmatprep.subr.mxu0 0.0
      %701 = vmatpush1.msra.mxu0 0.0
      %702 = vmatprep.subr.mxu0 0.0
      %703 = vmatpush1.msra.mxu0 0.0
      %704 = vmatprep.subr.mxu0 0.0
      %705 = vmatpush1.msra.mxu0 0.0
      %706 = vmatprep.subr.mxu0 0.0
      %707 = vmatpush1.msra.mxu0 0.0
      %708 = vmatprep.subr.mxu0 0.0
      %709 = vmatpush1.msra.mxu0 0.0
      %710 = vmatprep.subr.mxu0 0.0
      %711 = vmatpush1.msra.mxu0 0.0
      %712 = vmatprep.subr.mxu0 0.0
      %713 = vmatpush1.msra.mxu0 0.0
      %714 = vmatprep.subr.mxu0 0.0
      %715 = vmatpush1.msra.mxu0 0.0
      %716 = vmatprep.subr.mxu0 0.0
      %717 = vmatpush1.msra.mxu0 0.0
      %718 = vmatprep.subr.mxu0 0.0
      %719 = vmatpush1.msra.mxu0 0.0
      %720 = vmatprep.subr.mxu0 0.0
      %721 = vmatpush1.msra.mxu0 0.0
      %722 = vmatprep.mubr.f32.mxu0 0.0
      %723 = vmatmul.mubr.f32.gmra.mrb[0].mxu0 %v653
      %v724 = vpop.f32.mrb[0].mxu0
      %v725 = vadd.f32 %v649, %v724
      %v726 = vpop.f32.mrb[0].mxu0
      %727 = vmatprep.mubr.f32.mxu0 0.0
      %728 = vmatmul.mubr.f32.gmra.mrb[0].mxu0 %v656
      %v729 = vpop.f32.mrb[0].mxu0
      %v730 = vadd.f32 %v649, %v729
      %v731 = vpop.f32.mrb[0].mxu0
      %732 = vdwg.mxu0
      %v733 = vxor.u32 %v725, 2147483648
      %v734 = vxor.u32 %v730, 2147483648
      %v735 = vmul.f32 %v733, 1.442695
      %v736 = vpow.pop %v735
      %v737 = vmul.f32 %v734, 1.442695
      %v738 = vpow.pop %v737
      %v739 = vadd.f32 %v736, 1.0
      %v740 = vadd.f32 %v738, 1.0
      %v741 = vrcp.pop %v739
      %v742 = vmul.f32 1.0, %v741
      %v743 = vrcp.pop %v740
      %v744 = vmul.f32 1.0, %v743
      %v745 = vld [vmem:[%s5] sm:$0xff]
      %v746 = vld [vmem:[%s6] sm:$0x1]
      %v748 = vsel %vm311, %v503, 0
      %v751 = vsel %vm311, %v504, 0
      %753 = vmatprep.subr.mxu0 0.0
      %754 = vmatpush1.msra.mxu0 %v558
      %755 = vmatprep.subr.mxu0 0.0
      %756 = vmatpush1.msra.mxu0 0.0
      %757 = vmatprep.subr.mxu0 0.0
      %758 = vmatpush1.msra.mxu0 0.0
      %759 = vmatprep.subr.mxu0 0.0
      %760 = vmatpush1.msra.mxu0 0.0
      %761 = vmatprep.subr.mxu0 0.0
      %762 = vmatpush1.msra.mxu0 0.0
      %763 = vmatprep.subr.mxu0 0.0
      %764 = vmatpush1.msra.mxu0 0.0
      %765 = vmatprep.subr.mxu0 0.0
      %766 = vmatpush1.msra.mxu0 0.0
      %767 = vmatprep.subr.mxu0 0.0
      %768 = vmatpush1.msra.mxu0 0.0
      %769 = vmatprep.subr.mxu0 0.0
      %770 = vmatpush1.msra.mxu0 0.0
      %771 = vmatprep.subr.mxu0 0.0
      %772 = vmatpush1.msra.mxu0 0.0
      %773 = vmatprep.subr.mxu0 0.0
      %774 = vmatpush1.msra.mxu0 0.0
      %775 = vmatprep.subr.mxu0 0.0
      %776 = vmatpush1.msra.mxu0 0.0
      %777 = vmatprep.subr.mxu0 0.0
      %778 = vmatpush1.msra.mxu0 0.0
      %779 = vmatprep.subr.mxu0 0.0
      %780 = vmatpush1.msra.mxu0 0.0
      %781 = vmatprep.subr.mxu0 0.0
      %782 = vmatpush1.msra.mxu0 0.0
      %783 = vmatprep.subr.mxu0 0.0
      %784 = vmatpush1.msra.mxu0 0.0
      %785 = vmatprep.subr.mxu0 0.0
      %786 = vmatpush1.msra.mxu0 0.0
      %787 = vmatprep.subr.mxu0 0.0
      %788 = vmatpush1.msra.mxu0 0.0
      %789 = vmatprep.subr.mxu0 0.0
      %790 = vmatpush1.msra.mxu0 0.0
      %791 = vmatprep.subr.mxu0 0.0
      %792 = vmatpush1.msra.mxu0 0.0
      %793 = vmatprep.subr.mxu0 0.0
      %794 = vmatpush1.msra.mxu0 0.0
      %795 = vmatprep.subr.mxu0 0.0
      %796 = vmatpush1.msra.mxu0 0.0
      %797 = vmatprep.subr.mxu0 0.0
      %798 = vmatpush1.msra.mxu0 0.0
      %799 = vmatprep.subr.mxu0 0.0
      %800 = vmatpush1.msra.mxu0 0.0
      %801 = vmatprep.subr.mxu0 0.0
      %802 = vmatpush1.msra.mxu0 0.0
      %803 = vmatprep.subr.mxu0 0.0
      %804 = vmatpush1.msra.mxu0 0.0
      %805 = vmatprep.subr.mxu0 0.0
      %806 = vmatpush1.msra.mxu0 0.0
      %807 = vmatprep.subr.mxu0 0.0
      %808 = vmatpush1.msra.mxu0 0.0
      %809 = vmatprep.subr.mxu0 0.0
      %810 = vmatpush1.msra.mxu0 0.0
      %811 = vmatprep.subr.mxu0 0.0
      %812 = vmatpush1.msra.mxu0 0.0
      %813 = vmatprep.subr.mxu0 0.0
      %814 = vmatpush1.msra.mxu0 0.0
      %815 = vmatprep.subr.mxu0 0.0
      %816 = vmatpush1.msra.mxu0 0.0
      %817 = vmatprep.mubr.f32.mxu0 0.0
      %818 = vmatmul.mubr.f32.gmra.mrb[0].mxu0 %v748
      %v819 = vpop.f32.mrb[0].mxu0
      %v820 = vadd.f32 %v513, %v819
      %v821 = vpop.f32.mrb[0].mxu0
      %822 = vmatprep.mubr.f32.mxu0 0.0
      %823 = vmatmul.mubr.f32.gmra.mrb[0].mxu0 %v751
      %v824 = vpop.f32.mrb[0].mxu0
      %v825 = vadd.f32 %v513, %v824
      %v826 = vpop.f32.mrb[0].mxu0
      %827 = vdwg.mxu0
      %v828 = vadd.f32 %v820, 3.0
      %v829 = vadd.f32 %v825, 3.0
      %v830 = vmax.f32 %v828, 0.0
      %v831 = vmax.f32 %v829, 0.0
      %v832 = vmin.f32 %v830, 6.0
      %v833 = vmin.f32 %v831, 6.0
      %v834 = vmul.f32 %v820, %v832
      %v835 = vmul.f32 %v825, %v833
      %v836 = vmul.f32 %v834, 0.16666667
      %v837 = vmul.f32 %v835, 0.16666667
      %v839 = vlaneseq
      %v840 = vshrl.u32 %v839, 7
      %v841 = vsub.s32 0, %v840
      %v842 = vrot.slane %v746, %v841
      %v845 = vsel %vm651, %v836, 0
      %v848 = vsel %vm651, %v837, 0
      %850 = vmatprep.subr.mxu0 0.0
      %851 = vmatpush1.msra.mxu0 %v745
      %852 = vmatprep.subr.mxu0 0.0
      %853 = vmatpush1.msra.mxu0 0.0
      %854 = vmatprep.subr.mxu0 0.0
      %855 = vmatpush1.msra.mxu0 0.0
      %856 = vmatprep.subr.mxu0 0.0
      %857 = vmatpush1.msra.mxu0 0.0
      %858 = vmatprep.subr.mxu0 0.0
      %859 = vmatpush1.msra.mxu0 0.0
      %860 = vmatprep.subr.mxu0 0.0
      %861 = vmatpush1.msra.mxu0 0.0
      %862 = vmatprep.subr.mxu0 0.0
      %863 = vmatpush1.msra.mxu0 0.0
      %864 = vmatprep.subr.mxu0 0.0
      %865 = vmatpush1.msra.mxu0 0.0
      %866 = vmatprep.subr.mxu0 0.0
      %867 = vmatpush1.msra.mxu0 0.0
      %868 = vmatprep.subr.mxu0 0.0
      %869 = vmatpush1.msra.mxu0 0.0
      %870 = vmatprep.subr.mxu0 0.0
      %871 = vmatpush1.msra.mxu0 0.0
      %872 = vmatprep.subr.mxu0 0.0
      %873 = vmatpush1.msra.mxu0 0.0
      %874 = vmatprep.subr.mxu0 0.0
      %875 = vmatpush1.msra.mxu0 0.0
      %876 = vmatprep.subr.mxu0 0.0
      %877 = vmatpush1.msra.mxu0 0.0
      %878 = vmatprep.subr.mxu0 0.0
      %879 = vmatpush1.msra.mxu0 0.0
      %880 = vmatprep.subr.mxu0 0.0
      %881 = vmatpush1.msra.mxu0 0.0
      %882 = vmatprep.subr.mxu0 0.0
      %883 = vmatpush1.msra.mxu0 0.0
      %884 = vmatprep.subr.mxu0 0.0
      %885 = vmatpush1.msra.mxu0 0.0
      %886 = vmatprep.subr.mxu0 0.0
      %887 = vmatpush1.msra.mxu0 0.0
      %888 = vmatprep.subr.mxu0 0.0
      %889 = vmatpush1.msra.mxu0 0.0
      %890 = vmatprep.subr.mxu0 0.0
      %891 = vmatpush1.msra.mxu0 0.0
      %892 = vmatprep.subr.mxu0 0.0
      %893 = vmatpush1.msra.mxu0 0.0
      %894 = vmatprep.subr.mxu0 0.0
      %895 = vmatpush1.msra.mxu0 0.0
      %896 = vmatprep.subr.mxu0 0.0
      %897 = vmatpush1.msra.mxu0 0.0
      %898 = vmatprep.subr.mxu0 0.0
      %899 = vmatpush1.msra.mxu0 0.0
      %900 = vmatprep.subr.mxu0 0.0
      %901 = vmatpush1.msra.mxu0 0.0
      %902 = vmatprep.subr.mxu0 0.0
      %903 = vmatpush1.msra.mxu0 0.0
      %904 = vmatprep.subr.mxu0 0.0
      %905 = vmatpush1.msra.mxu0 0.0
      %906 = vmatprep.subr.mxu0 0.0
      %907 = vmatpush1.msra.mxu0 0.0
      %908 = vmatprep.subr.mxu0 0.0
      %909 = vmatpush1.msra.mxu0 0.0
      %910 = vmatprep.subr.mxu0 0.0
      %911 = vmatpush1.msra.mxu0 0.0
      %912 = vmatprep.subr.mxu0 0.0
      %913 = vmatpush1.msra.mxu0 0.0
      %914 = vmatprep.mubr.f32.mxu0 0.0
      %915 = vmatmul.mubr.f32.gmra.mrb[0].mxu0 %v845
      %v916 = vpop.f32.mrb[0].mxu0
      %v917 = vadd.f32 %v842, %v916
      %v918 = vpop.f32.mrb[0].mxu0
      %919 = vmatprep.mubr.f32.mxu0 0.0
      %920 = vmatmul.mubr.f32.gmra.mrb[0].mxu0 %v848
      %v921 = vpop.f32.mrb[0].mxu0
      %v922 = vadd.f32 %v842, %v921
      %v923 = vpop.f32.mrb[0].mxu0
      %924 = vdwg.mxu0
      %v925 = vxor.u32 %v917, 2147483648
      %v926 = vxor.u32 %v922, 2147483648
      %v927 = vmul.f32 %v925, 1.442695
      %v928 = vpow.pop %v927
      %v929 = vmul.f32 %v926, 1.442695
      %v930 = vpow.pop %v929
      %v931 = vadd.f32 %v928, 1.0
      %v932 = vadd.f32 %v930, 1.0
      %v933 = vrcp.pop %v931
      %v934 = vmul.f32 1.0, %v933
      %v935 = vrcp.pop %v932
      %v936 = vmul.f32 1.0, %v935
      %v939 = vcombine.high %v742, %v742
      %v941 = vunpack.c.l.s4 1966171168
      %v942 = vunpack.c.0.s8 %v941
      %v943 = vlaneseq
      %v944 = vshrl.u32 %v943, 7
      %v945 = vsub.s32 %v942, %v944
      %v946 = vrot.slane %v742, %v945
      %v948 = vunpack.c.l.s4 1966171168
      %v949 = vunpack.c.0.s8 %v948
      %v950 = vlaneseq
      %v951 = vshrl.u32 %v950, 7
      %v952 = vsub.s32 %v949, %v951
      %v953 = vrot.slane %v939, %v952
      %v954 = vcombine.high %v946, %v946
      %v955 = vcombine.high %v953, %v953
      %v957 = vunpack.c.l.s4 1966171168
      %v958 = vunpack.c.0.s8 %v957
      %v959 = vlaneseq
      %v960 = vshrl.u32 %v959, 7
      %v961 = vsub.s32 %v958, %v960
      %v962 = vrot.slane %v946, %v961
      %v964 = vunpack.c.l.s4 1966171168
      %v965 = vunpack.c.0.s8 %v964
      %v966 = vlaneseq
      %v967 = vshrl.u32 %v966, 7
      %v968 = vsub.s32 %v965, %v967
      %v969 = vrot.slane %v953, %v968
      %v971 = vunpack.c.l.s4 1966171168
      %v972 = vunpack.c.0.s8 %v971
      %v973 = vlaneseq
      %v974 = vshrl.u32 %v973, 7
      %v975 = vsub.s32 %v972, %v974
      %v976 = vrot.slane %v954, %v975
      %v978 = vunpack.c.l.s4 1966171168
      %v979 = vunpack.c.0.s8 %v978
      %v980 = vlaneseq
      %v981 = vshrl.u32 %v980, 7
      %v982 = vsub.s32 %v979, %v981
      %v983 = vrot.slane %v955, %v982
      %v984 = vcombine.high %v962, %v962
      %v985 = vcombine.high %v969, %v969
      %v986 = vcombine.high %v976, %v976
      %v987 = vcombine.high %v983, %v983
      %v988 = vcombine.high %v744, %v744
      %v990 = vunpack.c.l.s4 1966171168
      %v991 = vunpack.c.0.s8 %v990
      %v992 = vlaneseq
      %v993 = vshrl.u32 %v992, 7
      %v994 = vsub.s32 %v991, %v993
      %v995 = vrot.slane %v744, %v994
      %v997 = vunpack.c.l.s4 1966171168
      %v998 = vunpack.c.0.s8 %v997
      %v999 = vlaneseq
      %v1000 = vshrl.u32 %v999, 7
      %v1001 = vsub.s32 %v998, %v1000
      %v1002 = vrot.slane %v988, %v1001
      %v1003 = vcombine.high %v995, %v995
      %v1004 = vcombine.high %v1002, %v1002
      %v1006 = vunpack.c.l.s4 1966171168
      %v1007 = vunpack.c.0.s8 %v1006
      %v1008 = vlaneseq
      %v1009 = vshrl.u32 %v1008, 7
      %v1010 = vsub.s32 %v1007, %v1009
      %v1011 = vrot.slane %v995, %v1010
      %v1013 = vunpack.c.l.s4 1966171168
      %v1014 = vunpack.c.0.s8 %v1013
      %v1015 = vlaneseq
      %v1016 = vshrl.u32 %v1015, 7
      %v1017 = vsub.s32 %v1014, %v1016
      %v1018 = vrot.slane %v1002, %v1017
      %v1020 = vunpack.c.l.s4 1966171168
      %v1021 = vunpack.c.0.s8 %v1020
      %v1022 = vlaneseq
      %v1023 = vshrl.u32 %v1022, 7
      %v1024 = vsub.s32 %v1021, %v1023
      %v1025 = vrot.slane %v1003, %v1024
      %v1027 = vunpack.c.l.s4 1966171168
      %v1028 = vunpack.c.0.s8 %v1027
      %v1029 = vlaneseq
      %v1030 = vshrl.u32 %v1029, 7
      %v1031 = vsub.s32 %v1028, %v1030
      %v1032 = vrot.slane %v1004, %v1031
      %v1033 = vcombine.high %v1011, %v1011
      %v1034 = vcombine.high %v1018, %v1018
      %v1035 = vcombine.high %v1025, %v1025
      %v1036 = vcombine.high %v1032, %v1032
      %v1037 = vlaneseq
      %v1038 = vshrl.u32 %v1037, 7
      %v1039 = vsub.s32 0, %v1038
      %v1040 = vrot.slane %v962, %v1039
      %v1041 = vlaneseq
      %v1042 = vshrl.u32 %v1041, 7
      %v1043 = vsub.s32 0, %v1042
      %v1044 = vrot.slane %v976, %v1043
      %v1045 = vlaneseq
      %v1046 = vshrl.u32 %v1045, 7
      %v1047 = vsub.s32 0, %v1046
      %v1048 = vrot.slane %v984, %v1047
      %v1049 = vlaneseq
      %v1050 = vshrl.u32 %v1049, 7
      %v1051 = vsub.s32 0, %v1050
      %v1052 = vrot.slane %v986, %v1051
      %v1053 = vlaneseq
      %v1054 = vshrl.u32 %v1053, 7
      %v1055 = vsub.s32 0, %v1054
      %v1056 = vrot.slane %v969, %v1055
      %v1057 = vlaneseq
      %v1058 = vshrl.u32 %v1057, 7
      %v1059 = vsub.s32 0, %v1058
      %v1060 = vrot.slane %v983, %v1059
      %v1061 = vlaneseq
      %v1062 = vshrl.u32 %v1061, 7
      %v1063 = vsub.s32 0, %v1062
      %v1064 = vrot.slane %v985, %v1063
      %v1065 = vlaneseq
      %v1066 = vshrl.u32 %v1065, 7
      %v1067 = vsub.s32 0, %v1066
      %v1068 = vrot.slane %v987, %v1067
      %v1069 = vlaneseq
      %v1070 = vshrl.u32 %v1069, 7
      %v1071 = vsub.s32 0, %v1070
      %v1072 = vrot.slane %v1011, %v1071
      %v1073 = vlaneseq
      %v1074 = vshrl.u32 %v1073, 7
      %v1075 = vsub.s32 0, %v1074
      %v1076 = vrot.slane %v1025, %v1075
      %v1077 = vlaneseq
      %v1078 = vshrl.u32 %v1077, 7
      %v1079 = vsub.s32 0, %v1078
      %v1080 = vrot.slane %v1033, %v1079
      %v1081 = vlaneseq
      %v1082 = vshrl.u32 %v1081, 7
      %v1083 = vsub.s32 0, %v1082
      %v1084 = vrot.slane %v1035, %v1083
      %v1085 = vlaneseq
      %v1086 = vshrl.u32 %v1085, 7
      %v1087 = vsub.s32 0, %v1086
      %v1088 = vrot.slane %v1018, %v1087
      %v1089 = vlaneseq
      %v1090 = vshrl.u32 %v1089, 7
      %v1091 = vsub.s32 0, %v1090
      %v1092 = vrot.slane %v1032, %v1091
      %v1093 = vlaneseq
      %v1094 = vshrl.u32 %v1093, 7
      %v1095 = vsub.s32 0, %v1094
      %v1096 = vrot.slane %v1034, %v1095
      %v1097 = vlaneseq
      %v1098 = vshrl.u32 %v1097, 7
      %v1099 = vsub.s32 0, %v1098
      %v1100 = vrot.slane %v1036, %v1099
      %v1117 = vmul.f32 %v279, %v1040
      %v1118 = vmul.f32 %v280, %v1040
      %v1119 = vmul.f32 %v281, %v1044
      %v1120 = vmul.f32 %v282, %v1044
      %v1121 = vmul.f32 %v283, %v1048
      %v1122 = vmul.f32 %v284, %v1048
      %v1123 = vmul.f32 %v285, %v1052
      %v1124 = vmul.f32 %v286, %v1052
      %v1125 = vmul.f32 %v287, %v1056
      %v1126 = vmul.f32 %v288, %v1056
      %v1127 = vmul.f32 %v289, %v1060
      %v1128 = vmul.f32 %v290, %v1060
      %v1129 = vmul.f32 %v291, %v1064
      %v1130 = vmul.f32 %v292, %v1064
      %v1131 = vmul.f32 %v293, %v1068
      %v1132 = vmul.f32 %v294, %v1068
      %v1133 = vmul.f32 %v295, %v1072
      %v1134 = vmul.f32 %v296, %v1072
      %v1135 = vmul.f32 %v297, %v1076
      %v1136 = vmul.f32 %v298, %v1076
      %v1137 = vmul.f32 %v299, %v1080
      %v1138 = vmul.f32 %v300, %v1080
      %v1139 = vmul.f32 %v301, %v1084
      %v1140 = vmul.f32 %v302, %v1084
      %v1141 = vmul.f32 %v303, %v1088
      %v1142 = vmul.f32 %v304, %v1088
      %v1143 = vmul.f32 %v305, %v1092
      %v1144 = vmul.f32 %v306, %v1092
      %v1145 = vmul.f32 %v307, %v1096
      %v1146 = vmul.f32 %v308, %v1096
      %v1147 = vmul.f32 %v309, %v1100
      %v1148 = vmul.f32 %v310, %v1100
      %v1149 = vmul.f32 %v1117, %v934
      %v1150 = vmul.f32 %v1118, %v936
      %v1151 = vmul.f32 %v1119, %v934
      %v1152 = vmul.f32 %v1120, %v936
      %v1153 = vmul.f32 %v1121, %v934
      %v1154 = vmul.f32 %v1122, %v936
      %v1155 = vmul.f32 %v1123, %v934
      %v1156 = vmul.f32 %v1124, %v936
      %v1157 = vmul.f32 %v1125, %v934
      %v1158 = vmul.f32 %v1126, %v936
      %v1159 = vmul.f32 %v1127, %v934
      %v1160 = vmul.f32 %v1128, %v936
      %v1161 = vmul.f32 %v1129, %v934
      %v1162 = vmul.f32 %v1130, %v936
      %v1163 = vmul.f32 %v1131, %v934
      %v1164 = vmul.f32 %v1132, %v936
      %v1165 = vmul.f32 %v1133, %v934
      %v1166 = vmul.f32 %v1134, %v936
      %v1167 = vmul.f32 %v1135, %v934
      %v1168 = vmul.f32 %v1136, %v936
      %v1169 = vmul.f32 %v1137, %v934
      %v1170 = vmul.f32 %v1138, %v936
      %v1171 = vmul.f32 %v1139, %v934
      %v1172 = vmul.f32 %v1140, %v936
      %v1173 = vmul.f32 %v1141, %v934
      %v1174 = vmul.f32 %v1142, %v936
      %v1175 = vmul.f32 %v1143, %v934
      %v1176 = vmul.f32 %v1144, %v936
      %v1177 = vmul.f32 %v1145, %v934
      %v1178 = vmul.f32 %v1146, %v936
      %v1179 = vmul.f32 %v1147, %v934
      %v1180 = vmul.f32 %v1148, %v936
      %1181 = vst.msk [vmem:[%s278] sm:$0xff] %vm311, %v1149
      %1182 = vst.msk [vmem:[%s278 + $0x8] sm:$0xff] %vm311, %v1150
      %1183 = vst.msk [vmem:[%s278 + $0x10] sm:$0xff] %vm311, %v1151
      %1184 = vst.msk [vmem:[%s278 + $0x18] sm:$0xff] %vm311, %v1152
      %1185 = vst.msk [vmem:[%s278 + $0x20] sm:$0xff] %vm311, %v1153
      %1186 = vst.msk [vmem:[%s278 + $0x28] sm:$0xff] %vm311, %v1154
      %1187 = vst.msk [vmem:[%s278 + $0x30] sm:$0xff] %vm311, %v1155
      %1188 = vst.msk [vmem:[%s278 + $0x38] sm:$0xff] %vm311, %v1156
      %1189 = vst.msk [vmem:[%s278 + $0x40] sm:$0xff] %vm311, %v1157
      %1190 = vst.msk [vmem:[%s278 + $0x48] sm:$0xff] %vm311, %v1158
      %1191 = vst.msk [vmem:[%s278 + $0x50] sm:$0xff] %vm311, %v1159
      %1192 = vst.msk [vmem:[%s278 + $0x58] sm:$0xff] %vm311, %v1160
      %1193 = vst.msk [vmem:[%s278 + $0x60] sm:$0xff] %vm311, %v1161
      %1194 = vst.msk [vmem:[%s278 + $0x68] sm:$0xff] %vm311, %v1162
      %1195 = vst.msk [vmem:[%s278 + $0x70] sm:$0xff] %vm311, %v1163
      %1196 = vst.msk [vmem:[%s278 + $0x78] sm:$0xff] %vm311, %v1164
      %1197 = vst.msk [vmem:[%s278 + $0x80] sm:$0xff] %vm311, %v1165
      %1198 = vst.msk [vmem:[%s278 + $0x88] sm:$0xff] %vm311, %v1166
      %1199 = vst.msk [vmem:[%s278 + $0x90] sm:$0xff] %vm311, %v1167
      %1200 = vst.msk [vmem:[%s278 + $0x98] sm:$0xff] %vm311, %v1168
      %1201 = vst.msk [vmem:[%s278 + $0xa0] sm:$0xff] %vm311, %v1169
      %1202 = vst.msk [vmem:[%s278 + $0xa8] sm:$0xff] %vm311, %v1170
      %1203 = vst.msk [vmem:[%s278 + $0xb0] sm:$0xff] %vm311, %v1171
      %1204 = vst.msk [vmem:[%s278 + $0xb8] sm:$0xff] %vm311, %v1172
      %1205 = vst.msk [vmem:[%s278 + $0xc0] sm:$0xff] %vm311, %v1173
      %1206 = vst.msk [vmem:[%s278 + $0xc8] sm:$0xff] %vm311, %v1174
      %1207 = vst.msk [vmem:[%s278 + $0xd0] sm:$0xff] %vm311, %v1175
      %1208 = vst.msk [vmem:[%s278 + $0xd8] sm:$0xff] %vm311, %v1176
      %1209 = vst.msk [vmem:[%s278 + $0xe0] sm:$0xff] %vm311, %v1177
      %1210 = vst.msk [vmem:[%s278 + $0xe8] sm:$0xff] %vm311, %v1178
      %1211 = vst.msk [vmem:[%s278 + $0xf0] sm:$0xff] %vm311, %v1179
      %1212 = vst.msk [vmem:[%s278 + $0xf8] sm:$0xff] %vm311, %v1180
      %p1213 = scmp.lt.s32.totalorder %s18, 1
      %s1214 = scalar_select %p1213, %s18, 1
      %s1215 = smul.addr %s1214, 32
      %s1216 = smul.addr %s1215, 8
      %s1217 = scalar_lea.vmem %s7, %s1216
      // Predicated region
      $region49: #{tpu_custom_call.1} parent=47 // pred_check
        %p1218 = pneg %p188
      $region50: #{tpu_custom_call.1} parent=47 // pred_check_branch
        %1220 = sbr.rel (%p1218) target = $region52
      $region51: #{tpu_custom_call.1} parent=47 // pred_region
        _
      $region52: #{tpu_custom_call.1} parent=47 // pred_fallthru
        _
    $region48: #{tpu_custom_call.1} parent=5 // pred_fallthru
      _
    %p1221 = scmp.le.s32.totalorder 2, %s13
    // Predicated region
    $region53: #{tpu_custom_call.1} parent=5 // pred_check
      %p1222 = pneg %p1221
    $region54: #{tpu_custom_call.1} parent=5 // pred_check_branch
      %1224 = sbr.rel (%p1222) target = $region56
    $region55: #{tpu_custom_call.1} parent=5 // pred_region
      %s1225 = ssub.s32 %s13, 2
      // Predicated region
      $region57: #{tpu_custom_call.1} parent=55 // pred_check
        %p1226 = pneg %p194
      $region58: #{tpu_custom_call.1} parent=55 // pred_check_branch
        %1228 = sbr.rel (%p1226) target = $region60
      $region59: #{tpu_custom_call.1} parent=55 // pred_region
        %p1229 = scmp.lt.s32.totalorder %s19, 1
        %s1230 = scalar_select %p1229, %s19, 1
        %s1231 = smul.addr %s1230, 32
        %s1232 = smul.addr %s1231, 8
        %s1233 = scalar_lea.vmem %s7, %s1232
      $region60: #{tpu_custom_call.1} parent=55 // pred_fallthru
        _
    $region56: #{tpu_custom_call.1} parent=5 // pred_fallthru
      _
  $region6: #{tpu_custom_call.1} parent=0 // loop_footer
    %s17 = sadd.s32 1, %s13
  $region7: #{tpu_custom_call.1} parent=0 // loop_footer_branch
    %12 = sbr.rel target = $region3
  $region8: #{tpu_custom_call.1} parent=0 // loop_exit
    _

</llo_original>
